<compile_context>
chip_gen: v7x
topology: tpu7x:2x2x1
jax: 0.10.0
libtpu: 0.0.40
codegen_flags: <defaults>
</compile_context>

<pallas_src>
import jax
import jax.numpy as jnp
from jax.experimental import pallas as pl
from jax.experimental.pallas import tpu as pltpu

N = 24       # example batch (exercises a multi-step grid)
L = 6        # input sequence length (conv stack reduces it to 1)
LANE = 128   # TPU lane width
K_IN = 8     # padded input width (L=6 -> 8, sublane aligned)
OUT_W = 8    # narrow output width; valid columns are [:, :2]


def cnn_kernel(x_ref, w1_ref, w_ref, b_ref, out_ref):
    # x_ref: (TN, 8) f32 | w1_ref: (8, 128) bf16 | w_ref: (4, 128, 128) bf16
    # b_ref: (8, 128) f32 | out_ref: (TN, 8) f32
    x = x_ref[...].astype(jnp.bfloat16)
    b = b_ref[...]

    # conv1 (Conv1d(1,6,2)) fused into one block-structured matmul + relu
    h = jnp.dot(x, w1_ref[...], preferred_element_type=jnp.float32)
    h = jnp.maximum(h + b[0:1, :], 0.0).astype(jnp.bfloat16)
    # conv2 (Conv1d(6,16,5), output length 1 -> flat matmul) + relu
    h = jnp.dot(h, w_ref[0], preferred_element_type=jnp.float32)
    h = jnp.maximum(h + b[1:2, :], 0.0).astype(jnp.bfloat16)
    # conv3 (Conv1d(16,32,1) == matmul) + relu
    h = jnp.dot(h, w_ref[1], preferred_element_type=jnp.float32)
    h = jnp.maximum(h + b[2:3, :], 0.0).astype(jnp.bfloat16)
    # fc1 + relu
    h = jnp.dot(h, w_ref[2], preferred_element_type=jnp.float32)
    h = jnp.maximum(h + b[3:4, :], 0.0).astype(jnp.bfloat16)
    # fc2 -- narrow (TN, 8) store; valid columns are [:, :2]
    y = jnp.dot(h, w_ref[3], preferred_element_type=jnp.float32) + b[4:5, :]
    out_ref[...] = y[:, :OUT_W]


def init_params(key):
    """Deterministic parameter init (PyTorch-default-style uniform bounds)."""
    ks = jax.random.split(key, 10)

    def u(k, shape, fan_in):
        bound = 1.0 / jnp.sqrt(float(fan_in))
        return jax.random.uniform(k, shape, jnp.float32, -bound, bound)

    w1 = u(ks[0], (6, 1, 2), 1 * 2)      # Conv1d(1, 6, 2)
    b1 = u(ks[1], (6,), 1 * 2)
    w2 = u(ks[2], (16, 6, 5), 6 * 5)     # Conv1d(6, 16, 5)
    b2 = u(ks[3], (16,), 6 * 5)
    w3 = u(ks[4], (32, 16, 1), 16 * 1)   # Conv1d(16, 32, 1)
    b3 = u(ks[5], (32,), 16 * 1)
    fw1 = u(ks[6], (16, 32), 32)         # Linear(32, 16)
    fb1 = u(ks[7], (16,), 32)
    fw2 = u(ks[8], (2, 16), 16)          # Linear(16, 2)
    fb2 = u(ks[9], (2,), 16)
    return dict(w1=w1, b1=b1, w2=w2, b2=b2, w3=w3, b3=b3,
                fw1=fw1, fb1=fb1, fw2=fw2, fb2=fb2)


def _pad2(a, rows=LANE, cols=LANE):
    return jnp.pad(a, ((0, rows - a.shape[0]), (0, cols - a.shape[1])))


def _brow(v):
    return jnp.pad(v.astype(jnp.float32), (0, LANE - v.shape[0]))


def pack_params(params):
    """Pack all weights/biases into three lane-aligned VMEM-resident slabs."""
    # conv1 -> fused block-structured weight (6, 30): Wc1[l:l+2, l*6:(l+1)*6]=w1^T
    w1t = jnp.transpose(params["w1"][:, 0, :], (1, 0))        # (2, 6)
    wc1 = jnp.zeros((L, 5 * 6), jnp.float32)
    for l in range(5):
        wc1 = wc1.at[l:l + 2, l * 6:(l + 1) * 6].set(w1t)
    b1t = jnp.tile(params["b1"], 5)                           # (30,)
    # conv2 weight (co, ci, k) -> (k, ci, co) -> (30, 16); matches h1 layout
    w2r = jnp.transpose(params["w2"], (2, 1, 0)).reshape(30, 16)
    w3t = jnp.transpose(params["w3"][:, :, 0], (1, 0))        # (16, 32)
    fw1t = jnp.transpose(params["fw1"], (1, 0))               # (32, 16)
    fw2t = jnp.transpose(params["fw2"], (1, 0))               # (16, 2)

    w1slab = _pad2(wc1, K_IN, LANE).astype(jnp.bfloat16)      # (8, 128) bf16
    wslab = jnp.stack([_pad2(w2r), _pad2(w3t),
                       _pad2(fw1t), _pad2(fw2t)]
                      ).astype(jnp.bfloat16)                  # (4, 128, 128) bf16
    zero = jnp.zeros((LANE,), jnp.float32)
    bslab = jnp.stack([_brow(b1t), _brow(params["b2"]), _brow(params["b3"]),
                       _brow(params["fb1"]), _brow(params["fb2"]),
                       zero, zero, zero])                     # (8, 128) f32
    return w1slab, wslab, bslab


def _choose_tile(n):
    """Pick (tile_n, npad): balance padded rows vs per-step overhead; keep
    >=2 grid steps for n>=16 so v7x's two TensorCores both get work."""
    n8 = max(8, ((n + 7) // 8) * 8)
    if n8 < 16:
        return n8, n8
    cap = min(1024, ((n8 // 2 + 7) // 8) * 8)     # >= 2 steps, <= 1024 rows
    cands = sorted({t for t in (1024, 512, 256, 128, 64, 32, 16, 8, cap)
                    if 8 <= t <= cap}, reverse=True)
    step_overhead_rows = 192                       # ~0.35 us per step, in rows
    best = None
    for t in cands:
        npad = ((n8 + t - 1) // t) * t
        cost = npad + step_overhead_rows * (npad // t)
        key = (cost, -t)
        if best is None or key < best[0]:
            best = (key, t, npad)
    return best[1], best[2]


def cnn_forward(x_ncl, params):
    """x_ncl: (N, 1, L) float32, mirrors the PyTorch NCL input."""
    n = x_ncl.shape[0]
    w1slab, wslab, bslab = pack_params(params)
    tile_n, npad = _choose_tile(n)

    # Narrow (npad, 8) input: only 6 real values per row, 2 zero lanes of pad.
    x = jnp.zeros((npad, K_IN), jnp.float32).at[:n, :L].set(x_ncl[:, 0, :])

    out = pl.pallas_call(
        cnn_kernel,
        out_shape=jax.ShapeDtypeStruct((npad, OUT_W), jnp.float32),
        grid_spec=pltpu.PrefetchScalarGridSpec(
            num_scalar_prefetch=0,
            grid=(npad // tile_n,),
            in_specs=[
                pl.BlockSpec((tile_n, K_IN), lambda i: (i, 0)),
                pl.BlockSpec((K_IN, LANE), lambda i: (0, 0)),        # resident
                pl.BlockSpec((4, LANE, LANE), lambda i: (0, 0, 0)),  # resident
                pl.BlockSpec((8, LANE), lambda i: (0, 0)),           # resident
            ],
            out_specs=pl.BlockSpec((tile_n, OUT_W), lambda i: (i, 0)),
        ),
        compiler_params=pltpu.CompilerParams(
            dimension_semantics=("parallel",)),
    )(x, w1slab, wslab, bslab)
    return out[:n, :2]


def cnn_reference(x_ncl, params):
    """Pure-JAX f32 reference for correctness checking (same math, no Pallas)."""
    x = x_ncl[:, 0, :]                                        # (N, L)
    # conv1
    cols = jnp.stack([x[:, l:l + 2] for l in range(L - 1)], axis=1)  # (N,5,2)
    h1 = jnp.maximum(
        jnp.einsum("nlk,ck->nlc", cols, params["w1"][:, 0, :])
        + params["b1"], 0.0)                                  # (N,5,6) [l, c]
    # conv2 (full-width)
    h2 = jnp.maximum(
        jnp.einsum("nlc,ocl->no", h1, params["w2"]) + params["b2"], 0.0)
    # conv3 (1x1)
    h3 = jnp.maximum(h2 @ params["w3"][:, :, 0].T + params["b3"], 0.0)
    h4 = jnp.maximum(h3 @ params["fw1"].T + params["fb1"], 0.0)
    return h4 @ params["fw2"].T + params["fb2"]


if __name__ == "__main__":
    key = jax.random.PRNGKey(0)
    k_x, k_p = jax.random.split(key)
    x = jax.random.normal(k_x, (N, 1, L), dtype=jnp.float32)  # NCL like PyTorch
    params = init_params(k_p)

    out = jax.block_until_ready(cnn_forward(x, params))
    ref = jax.block_until_ready(cnn_reference(x, params))

    assert out.shape == (N, 2)
    # bf16 MXU path -> loosened tolerance vs the pure-f32 reference.
    assert jnp.allclose(out, ref, atol=2e-2, rtol=2e-2), "mismatch vs reference"
    print("KERNEL_OK")
</pallas_src>

<mosaic_0001>
module attributes {stable_mosaic.version = 11 : i64} {
  func.func @cnn_kernel(%arg0: i32, %arg1: memref<16x8xf32, #tpu.memory_space<vmem>>, %arg2: memref<8x128xbf16, #tpu.memory_space<vmem>>, %arg3: memref<4x128x128xbf16, #tpu.memory_space<vmem>>, %arg4: memref<8x128xf32, #tpu.memory_space<vmem>>, %arg5: memref<16x8xf32, #tpu.memory_space<vmem>>) attributes {dimension_semantics = [#tpu.dimension_semantics<parallel>], iteration_bounds = array<i64: 2>, scalar_prefetch = 0 : i64, scratch_operands = 0 : i64, tpu.core_type = #tpu.core_type<tc>, window_params = [{transform_indices = @transform_0, window_bounds = array<i64: 16, 8>}, {pipeline_mode = #tpu.pipeline_mode<synchronous>, transform_indices = @transform_1, window_bounds = array<i64: 8, 128>}, {pipeline_mode = #tpu.pipeline_mode<synchronous>, transform_indices = @transform_2, window_bounds = array<i64: 4, 128, 128>}, {pipeline_mode = #tpu.pipeline_mode<synchronous>, transform_indices = @transform_3, window_bounds = array<i64: 8, 128>}, {transform_indices = @transform_4, window_bounds = array<i64: 16, 8>}]} {
    %c0 = arith.constant 0 : index
    %c0_0 = arith.constant 0 : index
    %0 = vector.load %arg1[%c0, %c0_0] : memref<16x8xf32, #tpu.memory_space<vmem>>, vector<16x8xf32>
    %1 = arith.truncf %0 : vector<16x8xf32> to vector<16x8xbf16>
    %c0_1 = arith.constant 0 : index
    %c0_2 = arith.constant 0 : index
    %2 = vector.load %arg4[%c0_1, %c0_2] : memref<8x128xf32, #tpu.memory_space<vmem>>, vector<8x128xf32>
    %c0_3 = arith.constant 0 : index
    %c0_4 = arith.constant 0 : index
    %3 = vector.load %arg2[%c0_3, %c0_4] : memref<8x128xbf16, #tpu.memory_space<vmem>>, vector<8x128xbf16>
    %cst = arith.constant dense<0.000000e+00> : vector<16x128xf32>
    %4 = tpu.matmul %1, %3, %cst {dimension_numbers = #tpu.dot_dimension_numbers<[1], [0], [0], [1], [0, 0, 1, 1], [], []>} : vector<16x8xbf16>, vector<8x128xbf16>, vector<16x128xf32> -> vector<16x128xf32>
    %5 = vector.extract_strided_slice %2 {offsets = [0, 0], sizes = [1, 128], strides = [1, 1]} : vector<8x128xf32> to vector<1x128xf32>
    %6 = vector.broadcast %5 : vector<1x128xf32> to vector<16x128xf32>
    %7 = arith.addf %4, %6 : vector<16x128xf32>
    %cst_5 = arith.constant 0.000000e+00 : f32
    %8 = vector.broadcast %cst_5 : f32 to vector<16x128xf32>
    %9 = arith.maximumf %7, %8 : vector<16x128xf32>
    %10 = arith.truncf %9 : vector<16x128xf32> to vector<16x128xbf16>
    %c0_6 = arith.constant 0 : index
    %c0_7 = arith.constant 0 : index
    %c0_8 = arith.constant 0 : index
    %11 = vector.load %arg3[%c0_6, %c0_7, %c0_8] : memref<4x128x128xbf16, #tpu.memory_space<vmem>>, vector<1x128x128xbf16>
    %12 = vector.shape_cast %11 : vector<1x128x128xbf16> to vector<128x128xbf16>
    %cst_9 = arith.constant dense<0.000000e+00> : vector<16x128xf32>
    %13 = tpu.matmul %10, %12, %cst_9 {dimension_numbers = #tpu.dot_dimension_numbers<[1], [0], [0], [1], [0, 0, 1, 1], [], []>} : vector<16x128xbf16>, vector<128x128xbf16>, vector<16x128xf32> -> vector<16x128xf32>
    %14 = vector.extract_strided_slice %2 {offsets = [1, 0], sizes = [1, 128], strides = [1, 1]} : vector<8x128xf32> to vector<1x128xf32>
    %15 = vector.broadcast %14 : vector<1x128xf32> to vector<16x128xf32>
    %16 = arith.addf %13, %15 : vector<16x128xf32>
    %cst_10 = arith.constant 0.000000e+00 : f32
    %17 = vector.broadcast %cst_10 : f32 to vector<16x128xf32>
    %18 = arith.maximumf %16, %17 : vector<16x128xf32>
    %19 = arith.truncf %18 : vector<16x128xf32> to vector<16x128xbf16>
    %c1 = arith.constant 1 : index
    %c0_11 = arith.constant 0 : index
    %c0_12 = arith.constant 0 : index
    %20 = vector.load %arg3[%c1, %c0_11, %c0_12] : memref<4x128x128xbf16, #tpu.memory_space<vmem>>, vector<1x128x128xbf16>
    %21 = vector.shape_cast %20 : vector<1x128x128xbf16> to vector<128x128xbf16>
    %cst_13 = arith.constant dense<0.000000e+00> : vector<16x128xf32>
    %22 = tpu.matmul %19, %21, %cst_13 {dimension_numbers = #tpu.dot_dimension_numbers<[1], [0], [0], [1], [0, 0, 1, 1], [], []>} : vector<16x128xbf16>, vector<128x128xbf16>, vector<16x128xf32> -> vector<16x128xf32>
    %23 = vector.extract_strided_slice %2 {offsets = [2, 0], sizes = [1, 128], strides = [1, 1]} : vector<8x128xf32> to vector<1x128xf32>
    %24 = vector.broadcast %23 : vector<1x128xf32> to vector<16x128xf32>
    %25 = arith.addf %22, %24 : vector<16x128xf32>
    %cst_14 = arith.constant 0.000000e+00 : f32
    %26 = vector.broadcast %cst_14 : f32 to vector<16x128xf32>
    %27 = arith.maximumf %25, %26 : vector<16x128xf32>
    %28 = arith.truncf %27 : vector<16x128xf32> to vector<16x128xbf16>
    %c2 = arith.constant 2 : index
    %c0_15 = arith.constant 0 : index
    %c0_16 = arith.constant 0 : index
    %29 = vector.load %arg3[%c2, %c0_15, %c0_16] : memref<4x128x128xbf16, #tpu.memory_space<vmem>>, vector<1x128x128xbf16>
    %30 = vector.shape_cast %29 : vector<1x128x128xbf16> to vector<128x128xbf16>
    %cst_17 = arith.constant dense<0.000000e+00> : vector<16x128xf32>
    %31 = tpu.matmul %28, %30, %cst_17 {dimension_numbers = #tpu.dot_dimension_numbers<[1], [0], [0], [1], [0, 0, 1, 1], [], []>} : vector<16x128xbf16>, vector<128x128xbf16>, vector<16x128xf32> -> vector<16x128xf32>
    %32 = vector.extract_strided_slice %2 {offsets = [3, 0], sizes = [1, 128], strides = [1, 1]} : vector<8x128xf32> to vector<1x128xf32>
    %33 = vector.broadcast %32 : vector<1x128xf32> to vector<16x128xf32>
    %34 = arith.addf %31, %33 : vector<16x128xf32>
    %cst_18 = arith.constant 0.000000e+00 : f32
    %35 = vector.broadcast %cst_18 : f32 to vector<16x128xf32>
    %36 = arith.maximumf %34, %35 : vector<16x128xf32>
    %37 = arith.truncf %36 : vector<16x128xf32> to vector<16x128xbf16>
    %c3 = arith.constant 3 : index
    %c0_19 = arith.constant 0 : index
    %c0_20 = arith.constant 0 : index
    %38 = vector.load %arg3[%c3, %c0_19, %c0_20] : memref<4x128x128xbf16, #tpu.memory_space<vmem>>, vector<1x128x128xbf16>
    %39 = vector.shape_cast %38 : vector<1x128x128xbf16> to vector<128x128xbf16>
    %cst_21 = arith.constant dense<0.000000e+00> : vector<16x128xf32>
    %40 = tpu.matmul %37, %39, %cst_21 {dimension_numbers = #tpu.dot_dimension_numbers<[1], [0], [0], [1], [0, 0, 1, 1], [], []>} : vector<16x128xbf16>, vector<128x128xbf16>, vector<16x128xf32> -> vector<16x128xf32>
    %41 = vector.extract_strided_slice %2 {offsets = [4, 0], sizes = [1, 128], strides = [1, 1]} : vector<8x128xf32> to vector<1x128xf32>
    %42 = vector.broadcast %41 : vector<1x128xf32> to vector<16x128xf32>
    %43 = arith.addf %40, %42 : vector<16x128xf32>
    %44 = vector.extract_strided_slice %43 {offsets = [0, 0], sizes = [16, 8], strides = [1, 1]} : vector<16x128xf32> to vector<16x8xf32>
    %c0_22 = arith.constant 0 : index
    %c0_23 = arith.constant 0 : index
    %45 = vector.load %arg5[%c0_22, %c0_23] : memref<16x8xf32, #tpu.memory_space<vmem>>, vector<16x8xf32>
    tpu.vector_store %arg5[%c0_22, %c0_23], %44 {strides = array<i32>} : memref<16x8xf32, #tpu.memory_space<vmem>>, vector<16x8xf32>,
    return
  }
  func.func @transform_0(%arg0: i32) -> (i32, i32) {
    %c0_i32 = arith.constant 0 : i32
    %c0_i32_0 = arith.constant 0 : i32
    return %arg0, %c0_i32 : i32, i32
  }
  func.func @transform_1(%arg0: i32) -> (i32, i32) {
    %c0_i32 = arith.constant 0 : i32
    %c0_i32_0 = arith.constant 0 : i32
    %c0_i32_1 = arith.constant 0 : i32
    return %c0_i32, %c0_i32_0 : i32, i32
  }
  func.func @transform_2(%arg0: i32) -> (i32, i32, i32) {
    %c0_i32 = arith.constant 0 : i32
    %c0_i32_0 = arith.constant 0 : i32
    %c0_i32_1 = arith.constant 0 : i32
    %c0_i32_2 = arith.constant 0 : i32
    return %c0_i32, %c0_i32_0, %c0_i32_1 : i32, i32, i32
  }
  func.func @transform_3(%arg0: i32) -> (i32, i32) {
    %c0_i32 = arith.constant 0 : i32
    %c0_i32_0 = arith.constant 0 : i32
    %c0_i32_1 = arith.constant 0 : i32
    return %c0_i32, %c0_i32_0 : i32, i32
  }
  func.func @transform_4(%arg0: i32) -> (i32, i32) {
    %c0_i32 = arith.constant 0 : i32
    %c0_i32_0 = arith.constant 0 : i32
    return %arg0, %c0_i32 : i32, i32
  }
}

</mosaic_0001>

<llo_original>
// kernel: tpu_custom_call.1
$region0: #{tpu_custom_call.1}
  #allocation0 [shape = 'u32[]', space=smem, size = 0x4, offset = 0x4, fixed_abs, tag = 'smem constant byte address 0x4 - core index']
  #allocation1 [shape = 'u32[144,128]{1,0:T(1,128)}', space=vmem, size = 0x12000, scoped, tag = 'internal scratch']
  %s0 = inlined_call_operand.vmem [shape: f32[32,8], index: 0, kind: input, shape index: {}]
  %s1 = inlined_call_operand.vmem [shape: bf16[8,128], index: 1, kind: input, shape index: {}]
  %s2 = inlined_call_operand.hbm [shape: bf16[4,128,128], index: 2, kind: input, shape index: {}]
  %s3 = inlined_call_operand.vmem [shape: f32[8,128], index: 3, kind: input, shape index: {}]
  %s4 = inlined_call_operand.vmem [shape: f32[32,8], index: 4, kind: output, shape index: {}]
  %s5 = sld [smem:[#allocation0]]
  $region53: #{tpu_custom_call.1} parent=0
    _
  %s7 = ssub.s32 1, %s5
  %s8 = scalar_select 0, %s7, %s5
  $region1: #{tpu_custom_call.1} parent=0
    #allocation2 [shape = 'u8[131072]{0}', space=vmem, size = 0x20000, scoped, tag = 'input window, operand 2, single buffered']
    #allocation3 [shape = 's32[2]{0}', space=sflag, size = 0x8, scoped, tag = 'scoped memory for tpu_custom_call.1']
    %9 = vsyncpa [#allocation3], 0
    loop: start=0, step=1, limit=4
    $region2: #{tpu_custom_call.1} parent=1 // loop_pre_header
      _
    $region3: #{tpu_custom_call.1} parent=1 // loop_header
      %s11 = sphi 0, %s15
      %p12 = scmp.ge.s32.totalorder %s11, 4
      %s21 = sphi 0, %s23
      %s24 = sphi 0, %s21
      %s25 = sphi 0, %s24
      %s41 = sphi 0, %s25
      %s45 = sphi 0, %s45
      %s47 = sphi 0, %s45
      %s48 = sphi 0, %s47
      %s62 = sphi 0, %s48
      %s66 = sphi 0, %s66
      %s68 = sphi 0, %s66
      %s69 = sphi 0, %s68
      %s83 = sphi 0, %s69
      %s87 = sphi 0, %s87
      %s89 = sphi 0, %s87
      %s90 = sphi 0, %s89
      %s104 = sphi 0, %s90
      %s110 = sphi 0, %s112
      %s113 = sphi 0, %s110
      %s114 = sphi 0, %s113
      %s130 = sphi 0, %s114
    $region4: #{tpu_custom_call.1} parent=1 // loop_header_branch
      %14 = sbr.rel (%p12) target = $region8
    $region5: #{tpu_custom_call.1} parent=1 // loop_body
      %s16 = ssub.s32 %s11, 1
      %s17 = ssub.s32 %s11, 2
      %s18 = sadd.s32 %s11, 1
      %s19 = ssub.s32 %s11, %s18
      %p20 = scmp.eq.s32.totalorder %s19, 0
      %s22 = sadd.s32 %s21, 1
      %s23 = scalar_select %p20, %s21, %s22
      %p26 = pneg %p20
      %p27 = scmp.eq.s32.totalorder %s11, 1
      %p28 = por %p26, %p27
      %p29 = scmp.ne.s32.totalorder %s21, %s24
      %p30 = scmp.eq.s32.totalorder %s11, 0
      %p31 = por %p29, %p30
      %p32 = scmp.ne.s32.totalorder %s21, %s24
      %p33 = scmp.eq.s32.totalorder %s16, 1
      %p34 = por %p32, %p33
      %p35 = scmp.ne.s32.totalorder %s24, %s25
      %p36 = scmp.eq.s32.totalorder %s16, 0
      %p37 = por %p35, %p36
      %p38 = scmp.ne.s32.totalorder %s24, %s25
      %p39 = scmp.eq.s32.totalorder %s17, 1
      %p40 = por %p38, %p39
      %p42 = scmp.ne.s32.totalorder %s25, %s41
      %p43 = scmp.eq.s32.totalorder %s17, 0
      %p44 = por %p42, %p43
      %s46 = sadd.s32 %s45, 1
      %p49 = scmp.eq.s32.totalorder %s11, 1
      %p50 = scmp.ne.s32.totalorder %s45, %s47
      %p51 = scmp.eq.s32.totalorder %s11, 0
      %p52 = por %p50, %p51
      %p53 = scmp.ne.s32.totalorder %s45, %s47
      %p54 = scmp.eq.s32.totalorder %s16, 1
      %p55 = por %p53, %p54
      %p56 = scmp.ne.s32.totalorder %s47, %s48
      %p57 = scmp.eq.s32.totalorder %s16, 0
      %p58 = por %p56, %p57
      %p59 = scmp.ne.s32.totalorder %s47, %s48
      %p60 = scmp.eq.s32.totalorder %s17, 1
      %p61 = por %p59, %p60
      %p63 = scmp.ne.s32.totalorder %s48, %s62
      %p64 = scmp.eq.s32.totalorder %s17, 0
      %p65 = por %p63, %p64
      %s67 = sadd.s32 %s66, 1
      %p70 = scmp.eq.s32.totalorder %s11, 1
      %p71 = scmp.ne.s32.totalorder %s66, %s68
      %p72 = scmp.eq.s32.totalorder %s11, 0
      %p73 = por %p71, %p72
      %p74 = scmp.ne.s32.totalorder %s66, %s68
      %p75 = scmp.eq.s32.totalorder %s16, 1
      %p76 = por %p74, %p75
      %p77 = scmp.ne.s32.totalorder %s68, %s69
      %p78 = scmp.eq.s32.totalorder %s16, 0
      %p79 = por %p77, %p78
      %p80 = scmp.ne.s32.totalorder %s68, %s69
      %p81 = scmp.eq.s32.totalorder %s17, 1
      %p82 = por %p80, %p81
      %p84 = scmp.ne.s32.totalorder %s69, %s83
      %p85 = scmp.eq.s32.totalorder %s17, 0
      %p86 = por %p84, %p85
      %s88 = sadd.s32 %s87, 1
      %p91 = scmp.eq.s32.totalorder %s11, 1
      %p92 = scmp.ne.s32.totalorder %s87, %s89
      %p93 = scmp.eq.s32.totalorder %s11, 0
      %p94 = por %p92, %p93
      %p95 = scmp.ne.s32.totalorder %s87, %s89
      %p96 = scmp.eq.s32.totalorder %s16, 1
      %p97 = por %p95, %p96
      %p98 = scmp.ne.s32.totalorder %s89, %s90
      %p99 = scmp.eq.s32.totalorder %s16, 0
      %p100 = por %p98, %p99
      %p101 = scmp.ne.s32.totalorder %s89, %s90
      %p102 = scmp.eq.s32.totalorder %s17, 1
      %p103 = por %p101, %p102
      %p105 = scmp.ne.s32.totalorder %s90, %s104
      %p106 = scmp.eq.s32.totalorder %s17, 0
      %p107 = por %p105, %p106
      %s108 = ssub.s32 %s11, %s18
      %p109 = scmp.eq.s32.totalorder %s108, 0
      %s111 = sadd.s32 %s110, 1
      %s112 = scalar_select %p109, %s110, %s111
      %p115 = pneg %p109
      %p116 = scmp.eq.s32.totalorder %s11, 1
      %p117 = por %p115, %p116
      %p118 = scmp.ne.s32.totalorder %s110, %s113
      %p119 = scmp.eq.s32.totalorder %s11, 0
      %p120 = por %p118, %p119
      %p121 = scmp.ne.s32.totalorder %s110, %s113
      %p122 = scmp.eq.s32.totalorder %s16, 1
      %p123 = por %p121, %p122
      %p124 = scmp.ne.s32.totalorder %s113, %s114
      %p125 = scmp.eq.s32.totalorder %s16, 0
      %p126 = por %p124, %p125
      %p127 = scmp.ne.s32.totalorder %s113, %s114
      %p128 = scmp.eq.s32.totalorder %s17, 1
      %p129 = por %p127, %p128
      %p131 = scmp.ne.s32.totalorder %s114, %s130
      %p132 = scmp.eq.s32.totalorder %s17, 0
      %p133 = por %p131, %p132
      %p134 = scmp.le.s32.totalorder 1, %s11
      %p135 = scmp.lt.s32.totalorder %s11, 3
      %p136 = pnand %p134, %p135
      %p137 = pneg %p136
      // Predicated region
      $region9: #{tpu_custom_call.1} parent=5 // pred_check
        _
      $region10: #{tpu_custom_call.1} parent=5 // pred_check_branch
        %139 = sbr.rel (%p136) target = $region12
      $region11: #{tpu_custom_call.1} parent=5 // pred_region
        %s140 = ssub.s32 %s11, 1
        // Predicated region
        $region13: #{tpu_custom_call.1} parent=11 // pred_check
          %p141 = pneg %p58
        $region14: #{tpu_custom_call.1} parent=11 // pred_check_branch
          %143 = sbr.rel (%p141) target = $region16
        $region15: #{tpu_custom_call.1} parent=11 // pred_region
          _
        $region16: #{tpu_custom_call.1} parent=11 // pred_fallthru
          _
        // Predicated region
        $region17: #{tpu_custom_call.1} parent=11 // pred_check
          %p144 = pneg %p79
        $region18: #{tpu_custom_call.1} parent=11 // pred_check_branch
          %146 = sbr.rel (%p144) target = $region20
        $region19: #{tpu_custom_call.1} parent=11 // pred_region
          %s148 = ssub.s32 4096, 4096
          %149 = vsyncadd [#allocation3], %s148
          %s150 = sshll.u32 [#allocation2], 4
          %s151 = int_to_ptr.vmem [resolvable:$true] %s150
          %156 = dma.hbm_to_vmem [thread:$0]  %s2, 4096, %s151, [#allocation3], 64, 64, 4
        $region20: #{tpu_custom_call.1} parent=11 // pred_fallthru
          _
        // Predicated region
        $region21: #{tpu_custom_call.1} parent=11 // pred_check
          %p157 = pneg %p100
        $region22: #{tpu_custom_call.1} parent=11 // pred_check_branch
          %159 = sbr.rel (%p157) target = $region24
        $region23: #{tpu_custom_call.1} parent=11 // pred_region
          _
        $region24: #{tpu_custom_call.1} parent=11 // pred_fallthru
          _
      $region12: #{tpu_custom_call.1} parent=5 // pred_fallthru
        _
      %p160 = scmp.lt.s32.totalorder %s11, 2
      // Predicated region
      $region25: #{tpu_custom_call.1} parent=5 // pred_check
        %p161 = pneg %p160
      $region26: #{tpu_custom_call.1} parent=5 // pred_check_branch
        %163 = sbr.rel (%p161) target = $region28
      $region27: #{tpu_custom_call.1} parent=5 // pred_region
        // Predicated region
        $region29: #{tpu_custom_call.1} parent=27 // pred_check
          %p164 = pneg %p31
        $region30: #{tpu_custom_call.1} parent=27 // pred_check_branch
          %166 = sbr.rel (%p164) target = $region32
        $region31: #{tpu_custom_call.1} parent=27 // pred_region
          %s167 = smul.u32 2, %s11
          %p168 = scmp.lt.s32.totalorder %s167, 3
          %s169 = scalar_select %p168, %s167, 3
          %s170 = smul.addr %s169, 8
          %s171 = scalar_lea.vmem %s0, %s170
          %s172 = smul.u32 2, %s11
        $region32: #{tpu_custom_call.1} parent=27 // pred_fallthru
          _
      $region28: #{tpu_custom_call.1} parent=5 // pred_fallthru
        _
      %p173 = scmp.le.s32.totalorder 1, %s11
      %p174 = scmp.lt.s32.totalorder %s11, 3
      %p175 = pnand %p173, %p174
      %p176 = pneg %p175
      // Predicated region
      $region33: #{tpu_custom_call.1} parent=5 // pred_check
        _
      $region34: #{tpu_custom_call.1} parent=5 // pred_check_branch
        %178 = sbr.rel (%p175) target = $region36
      $region35: #{tpu_custom_call.1} parent=5 // pred_region
        %s179 = ssub.s32 %s11, 1
        // Predicated region
        $region37: #{tpu_custom_call.1} parent=35 // pred_check
          %p180 = pneg %p79
        $region38: #{tpu_custom_call.1} parent=35 // pred_check_branch
          %182 = sbr.rel (%p180) target = $region40
        $region39: #{tpu_custom_call.1} parent=35 // pred_region
          %183 = dma.done [#allocation3], 4096
        $region40: #{tpu_custom_call.1} parent=35 // pred_fallthru
          _
        %s184 = smul.u32 2, %s16
        %p185 = scmp.lt.s32.totalorder %s184, 3
        %s186 = scalar_select %p185, %s184, 3
        %s187 = smul.addr %s186, 8
        %s188 = scalar_lea.vmem %s0, %s187
        %p189 = pneg %p37
        %p190 = pneg %p34
        %p191 = pneg %p58
        %p192 = pneg %p55
        %p193 = pneg %p79
        %p194 = pneg %p76
        %p195 = pneg %p100
        %p196 = pneg %p97
        %p197 = pneg %p126
        %p198 = pneg %p123
        %s199 = smul.u32 2, %s16
        %p200 = scmp.lt.s32.totalorder %s199, 3
        %s201 = scalar_select %p200, %s199, 3
        %s202 = smul.addr %s201, 8
        %s203 = scalar_lea.vmem %s4, %s202
        %s204 = smul.u32 2, %s16
        %p205 = scmp.lt.s32.totalorder %s204, 3
        %s206 = scalar_select %p205, %s204, 3
        %s207 = smul.addr %s206, 8
        %s208 = scalar_lea.vmem %s0, %s207
        %s209 = smul.u32 2, %s16
        %s210 = smul.u32 2, %s16
        %p211 = scmp.lt.s32.totalorder %s210, 3
        %s212 = scalar_select %p211, %s210, 3
        %s213 = smul.addr %s212, 8
        %s214 = scalar_lea.vmem %s4, %s213
        %s215 = smul.u32 2, %s16
        %v217 = vld [vmem:[%s208] sm:$0xff]
        %v218 = vld [vmem:[%s208 + $0x8] sm:$0xff]
        %v219 = vpack.c.bf16 %v218, %v217
        %v220 = vld [vmem:[%s3] sm:$0xff]
        %v221 = vld [vmem:[%s1] sm:$0xf]
        %v222 = vlaneseq
        %v223 = vshrl.u32 %v222, 7
        %v224 = vsub.s32 0, %v223
        %v225 = vrot.slane %v220, %v224
        %vm226 = vcmask 64512
        %v228 = vsel %vm226, %v219, 0
        %vm230 = vcmask 1043456
        %v232 = vsel %vm230, %v221, 0
        %234 = vmatprep.subr.bf16.mxu0 0
        %235 = vmatpush1.bf16.msra.mxu0 %v232
        %236 = vmatprep.subr.bf16.mxu0 0
        %237 = vmatpush1.bf16.msra.mxu0 0
        %238 = vmatprep.subr.bf16.mxu0 0
        %239 = vmatpush1.bf16.msra.mxu0 0
        %240 = vmatprep.subr.bf16.mxu0 0
        %241 = vmatpush1.bf16.msra.mxu0 0
        %242 = vmatprep.subr.bf16.mxu0 0
        %243 = vmatpush1.bf16.msra.mxu0 0
        %244 = vmatprep.subr.bf16.mxu0 0
        %245 = vmatpush1.bf16.msra.mxu0 0
        %246 = vmatprep.subr.bf16.mxu0 0
        %247 = vmatpush1.bf16.msra.mxu0 0
        %248 = vmatprep.subr.bf16.mxu0 0
        %249 = vmatpush1.bf16.msra.mxu0 0
        %250 = vmatprep.subr.bf16.mxu0 0
        %251 = vmatpush1.bf16.msra.mxu0 0
        %252 = vmatprep.subr.bf16.mxu0 0
        %253 = vmatpush1.bf16.msra.mxu0 0
        %254 = vmatprep.subr.bf16.mxu0 0
        %255 = vmatpush1.bf16.msra.mxu0 0
        %256 = vmatprep.subr.bf16.mxu0 0
        %257 = vmatpush1.bf16.msra.mxu0 0
        %258 = vmatprep.subr.bf16.mxu0 0
        %259 = vmatpush1.bf16.msra.mxu0 0
        %260 = vmatprep.subr.bf16.mxu0 0
        %261 = vmatpush1.bf16.msra.mxu0 0
        %262 = vmatprep.subr.bf16.mxu0 0
        %263 = vmatpush1.bf16.msra.mxu0 0
        %264 = vmatprep.subr.bf16.mxu0 0
        %265 = vmatpush1.bf16.msra.mxu0 0
        %266 = vmatprep.mubr.bf16.mxu0 0
        %267 = vmatmul.mubr.bf16.gmra.mrb[0].mxu0 %v228
        %v268 = vpop.f32.mrb[0].mxu0
        %v269 = vadd.f32 %v225, %v268
        %v270 = vpop.f32.mrb[0].mxu0
        %v271 = vpop.f32.mrb[0].mxu0
        %v272 = vadd.f32 %v225, %v271
        %v273 = vpop.f32.mrb[0].mxu0
        %274 = vdwg.mxu0
        %v275 = vmax.f32 %v269, 0.0
        %v276 = vmax.f32 %v272, 0.0
        %v277 = vpack.c.bf16 %v276, %v275
        %v278 = vld [vmem:[#allocation2] sm:$0xf]
        %v279 = vld [vmem:[#allocation2 + $0x4] sm:$0xf]
        %v280 = vld [vmem:[#allocation2 + $0x8] sm:$0xf]
        %v281 = vld [vmem:[#allocation2 + $0xc] sm:$0xf]
        %v282 = vld [vmem:[#allocation2 + $0x10] sm:$0xf]
        %v283 = vld [vmem:[#allocation2 + $0x14] sm:$0xf]
        %v284 = vld [vmem:[#allocation2 + $0x18] sm:$0xf]
        %v285 = vld [vmem:[#allocation2 + $0x1c] sm:$0xf]
        %v286 = vld [vmem:[#allocation2 + $0x20] sm:$0xf]
        %v287 = vld [vmem:[#allocation2 + $0x24] sm:$0xf]
        %v288 = vld [vmem:[#allocation2 + $0x28] sm:$0xf]
        %v289 = vld [vmem:[#allocation2 + $0x2c] sm:$0xf]
        %v290 = vld [vmem:[#allocation2 + $0x30] sm:$0xf]
        %v291 = vld [vmem:[#allocation2 + $0x34] sm:$0xf]
        %v292 = vld [vmem:[#allocation2 + $0x38] sm:$0xf]
        %v293 = vld [vmem:[#allocation2 + $0x3c] sm:$0xf]
        %v294 = vlaneseq
        %v295 = vshrl.u32 %v294, 7
        %v296 = vsub.s32 1, %v295
        %v297 = vrot.slane %v220, %v296
        %v314 = vunpack.c.l.b16 %v278
        %v315 = vunpack.c.l.b16 %v279
        %v316 = vunpack.c.l.b16 %v280
        %v317 = vunpack.c.l.b16 %v281
        %v318 = vunpack.c.l.b16 %v282
        %v319 = vunpack.c.l.b16 %v283
        %v320 = vunpack.c.l.b16 %v284
        %v321 = vunpack.c.l.b16 %v285
        %v322 = vunpack.c.l.b16 %v286
        %v323 = vunpack.c.l.b16 %v287
        %v324 = vunpack.c.l.b16 %v288
        %v325 = vunpack.c.l.b16 %v289
        %v326 = vunpack.c.l.b16 %v290
        %v327 = vunpack.c.l.b16 %v291
        %v328 = vunpack.c.l.b16 %v292
        %v329 = vunpack.c.l.b16 %v293
        %v330 = vpack.c.b16 %v315, %v314
        %v331 = vpack.c.b16 %v317, %v316
        %v332 = vpack.c.b16 %v319, %v318
        %v333 = vpack.c.b16 %v321, %v320
        %v334 = vpack.c.b16 %v323, %v322
        %v335 = vpack.c.b16 %v325, %v324
        %v336 = vpack.c.b16 %v327, %v326
        %v337 = vpack.c.b16 %v329, %v328
        %346 = vmatprep.subr.bf16.mxu0 0
        %347 = vmatpush1.bf16.msra.mxu0 %v330
        %348 = vmatprep.subr.bf16.mxu0 0
        %349 = vmatpush1.bf16.msra.mxu0 %v331
        %350 = vmatprep.subr.bf16.mxu0 0
        %351 = vmatpush1.bf16.msra.mxu0 %v332
        %352 = vmatprep.subr.bf16.mxu0 0
        %353 = vmatpush1.bf16.msra.mxu0 %v333
        %354 = vmatprep.subr.bf16.mxu0 0
        %355 = vmatpush1.bf16.msra.mxu0 %v334
        %356 = vmatprep.subr.bf16.mxu0 0
        %357 = vmatpush1.bf16.msra.mxu0 %v335
        %358 = vmatprep.subr.bf16.mxu0 0
        %359 = vmatpush1.bf16.msra.mxu0 %v336
        %360 = vmatprep.subr.bf16.mxu0 0
        %361 = vmatpush1.bf16.msra.mxu0 %v337
        %362 = vmatprep.subr.bf16.mxu0 0
        %363 = vmatpush1.bf16.msra.mxu0 0
        %364 = vmatprep.subr.bf16.mxu0 0
        %365 = vmatpush1.bf16.msra.mxu0 0
        %366 = vmatprep.subr.bf16.mxu0 0
        %367 = vmatpush1.bf16.msra.mxu0 0
        %368 = vmatprep.subr.bf16.mxu0 0
        %369 = vmatpush1.bf16.msra.mxu0 0
        %370 = vmatprep.subr.bf16.mxu0 0
        %371 = vmatpush1.bf16.msra.mxu0 0
        %372 = vmatprep.subr.bf16.mxu0 0
        %373 = vmatpush1.bf16.msra.mxu0 0
        %374 = vmatprep.subr.bf16.mxu0 0
        %375 = vmatpush1.bf16.msra.mxu0 0
        %376 = vmatprep.subr.bf16.mxu0 0
        %377 = vmatpush1.bf16.msra.mxu0 0
        %378 = vmatprep.mubr.bf16.mxu0 0
        %379 = vmatmul.mubr.bf16.gmra.mrb[0].mxu0 %v277
        %v380 = vpop.f32.mrb[0].mxu0
        %v381 = vadd.f32 %v297, %v380
        %v382 = vpop.f32.mrb[0].mxu0
        %v383 = vpop.f32.mrb[0].mxu0
        %v384 = vadd.f32 %v297, %v383
        %v385 = vpop.f32.mrb[0].mxu0
        %386 = vdwg.mxu0
        %v387 = vmax.f32 %v381, 0.0
        %v388 = vmax.f32 %v384, 0.0
        %v389 = vpack.c.bf16 %v388, %v387
        %s390 = scalar_lea.vmem [#allocation2], 64
        %v391 = vld [vmem:[%s390] sm:$0xf]
        %v392 = vld [vmem:[%s390 + $0x4] sm:$0xf]
        %v393 = vld [vmem:[%s390 + $0x8] sm:$0xf]
        %v394 = vld [vmem:[%s390 + $0xc] sm:$0xf]
        %v395 = vld [vmem:[%s390 + $0x10] sm:$0xf]
        %v396 = vld [vmem:[%s390 + $0x14] sm:$0xf]
        %v397 = vld [vmem:[%s390 + $0x18] sm:$0xf]
        %v398 = vld [vmem:[%s390 + $0x1c] sm:$0xf]
        %v399 = vld [vmem:[%s390 + $0x20] sm:$0xf]
        %v400 = vld [vmem:[%s390 + $0x24] sm:$0xf]
        %v401 = vld [vmem:[%s390 + $0x28] sm:$0xf]
        %v402 = vld [vmem:[%s390 + $0x2c] sm:$0xf]
        %v403 = vld [vmem:[%s390 + $0x30] sm:$0xf]
        %v404 = vld [vmem:[%s390 + $0x34] sm:$0xf]
        %v405 = vld [vmem:[%s390 + $0x38] sm:$0xf]
        %v406 = vld [vmem:[%s390 + $0x3c] sm:$0xf]
        %v407 = vlaneseq
        %v408 = vshrl.u32 %v407, 7
        %v409 = vsub.s32 2, %v408
        %v410 = vrot.slane %v220, %v409
        %v427 = vunpack.c.l.b16 %v391
        %v428 = vunpack.c.l.b16 %v392
        %v429 = vunpack.c.l.b16 %v393
        %v430 = vunpack.c.l.b16 %v394
        %v431 = vunpack.c.l.b16 %v395
        %v432 = vunpack.c.l.b16 %v396
        %v433 = vunpack.c.l.b16 %v397
        %v434 = vunpack.c.l.b16 %v398
        %v435 = vunpack.c.l.b16 %v399
        %v436 = vunpack.c.l.b16 %v400
        %v437 = vunpack.c.l.b16 %v401
        %v438 = vunpack.c.l.b16 %v402
        %v439 = vunpack.c.l.b16 %v403
        %v440 = vunpack.c.l.b16 %v404
        %v441 = vunpack.c.l.b16 %v405
        %v442 = vunpack.c.l.b16 %v406
        %v443 = vpack.c.b16 %v428, %v427
        %v444 = vpack.c.b16 %v430, %v429
        %v445 = vpack.c.b16 %v432, %v431
        %v446 = vpack.c.b16 %v434, %v433
        %v447 = vpack.c.b16 %v436, %v435
        %v448 = vpack.c.b16 %v438, %v437
        %v449 = vpack.c.b16 %v440, %v439
        %v450 = vpack.c.b16 %v442, %v441
        %459 = vmatprep.subr.bf16.mxu0 0
        %460 = vmatpush1.bf16.msra.mxu0 %v443
        %461 = vmatprep.subr.bf16.mxu0 0
        %462 = vmatpush1.bf16.msra.mxu0 %v444
        %463 = vmatprep.subr.bf16.mxu0 0
        %464 = vmatpush1.bf16.msra.mxu0 %v445
        %465 = vmatprep.subr.bf16.mxu0 0
        %466 = vmatpush1.bf16.msra.mxu0 %v446
        %467 = vmatprep.subr.bf16.mxu0 0
        %468 = vmatpush1.bf16.msra.mxu0 %v447
        %469 = vmatprep.subr.bf16.mxu0 0
        %470 = vmatpush1.bf16.msra.mxu0 %v448
        %471 = vmatprep.subr.bf16.mxu0 0
        %472 = vmatpush1.bf16.msra.mxu0 %v449
        %473 = vmatprep.subr.bf16.mxu0 0
        %474 = vmatpush1.bf16.msra.mxu0 %v450
        %475 = vmatprep.subr.bf16.mxu0 0
        %476 = vmatpush1.bf16.msra.mxu0 0
        %477 = vmatprep.subr.bf16.mxu0 0
        %478 = vmatpush1.bf16.msra.mxu0 0
        %479 = vmatprep.subr.bf16.mxu0 0
        %480 = vmatpush1.bf16.msra.mxu0 0
        %481 = vmatprep.subr.bf16.mxu0 0
        %482 = vmatpush1.bf16.msra.mxu0 0
        %483 = vmatprep.subr.bf16.mxu0 0
        %484 = vmatpush1.bf16.msra.mxu0 0
        %485 = vmatprep.subr.bf16.mxu0 0
        %486 = vmatpush1.bf16.msra.mxu0 0
        %487 = vmatprep.subr.bf16.mxu0 0
        %488 = vmatpush1.bf16.msra.mxu0 0
        %489 = vmatprep.subr.bf16.mxu0 0
        %490 = vmatpush1.bf16.msra.mxu0 0
        %491 = vmatprep.mubr.bf16.mxu0 0
        %492 = vmatmul.mubr.bf16.gmra.mrb[0].mxu0 %v389
        %v493 = vpop.f32.mrb[0].mxu0
        %v494 = vadd.f32 %v410, %v493
        %v495 = vpop.f32.mrb[0].mxu0
        %v496 = vpop.f32.mrb[0].mxu0
        %v497 = vadd.f32 %v410, %v496
        %v498 = vpop.f32.mrb[0].mxu0
        %499 = vdwg.mxu0
        %v500 = vmax.f32 %v494, 0.0
        %v501 = vmax.f32 %v497, 0.0
        %v502 = vpack.c.bf16 %v501, %v500
        %s503 = scalar_lea.vmem [#allocation2], 128
        %v504 = vld [vmem:[%s503] sm:$0xf]
        %v505 = vld [vmem:[%s503 + $0x4] sm:$0xf]
        %v506 = vld [vmem:[%s503 + $0x8] sm:$0xf]
        %v507 = vld [vmem:[%s503 + $0xc] sm:$0xf]
        %v508 = vld [vmem:[%s503 + $0x10] sm:$0xf]
        %v509 = vld [vmem:[%s503 + $0x14] sm:$0xf]
        %v510 = vld [vmem:[%s503 + $0x18] sm:$0xf]
        %v511 = vld [vmem:[%s503 + $0x1c] sm:$0xf]
        %v512 = vld [vmem:[%s503 + $0x20] sm:$0xf]
        %v513 = vld [vmem:[%s503 + $0x24] sm:$0xf]
        %v514 = vld [vmem:[%s503 + $0x28] sm:$0xf]
        %v515 = vld [vmem:[%s503 + $0x2c] sm:$0xf]
        %v516 = vld [vmem:[%s503 + $0x30] sm:$0xf]
        %v517 = vld [vmem:[%s503 + $0x34] sm:$0xf]
        %v518 = vld [vmem:[%s503 + $0x38] sm:$0xf]
        %v519 = vld [vmem:[%s503 + $0x3c] sm:$0xf]
        %v520 = vlaneseq
        %v521 = vshrl.u32 %v520, 7
        %v522 = vsub.s32 3, %v521
        %v523 = vrot.slane %v220, %v522
        %v540 = vunpack.c.l.b16 %v504
        %v541 = vunpack.c.l.b16 %v505
        %v542 = vunpack.c.l.b16 %v506
        %v543 = vunpack.c.l.b16 %v507
        %v544 = vunpack.c.l.b16 %v508
        %v545 = vunpack.c.l.b16 %v509
        %v546 = vunpack.c.l.b16 %v510
        %v547 = vunpack.c.l.b16 %v511
        %v548 = vunpack.c.l.b16 %v512
        %v549 = vunpack.c.l.b16 %v513
        %v550 = vunpack.c.l.b16 %v514
        %v551 = vunpack.c.l.b16 %v515
        %v552 = vunpack.c.l.b16 %v516
        %v553 = vunpack.c.l.b16 %v517
        %v554 = vunpack.c.l.b16 %v518
        %v555 = vunpack.c.l.b16 %v519
        %v556 = vpack.c.b16 %v541, %v540
        %v557 = vpack.c.b16 %v543, %v542
        %v558 = vpack.c.b16 %v545, %v544
        %v559 = vpack.c.b16 %v547, %v546
        %v560 = vpack.c.b16 %v549, %v548
        %v561 = vpack.c.b16 %v551, %v550
        %v562 = vpack.c.b16 %v553, %v552
        %v563 = vpack.c.b16 %v555, %v554
        %572 = vmatprep.subr.bf16.mxu0 0
        %573 = vmatpush1.bf16.msra.mxu0 %v556
        %574 = vmatprep.subr.bf16.mxu0 0
        %575 = vmatpush1.bf16.msra.mxu0 %v557
        %576 = vmatprep.subr.bf16.mxu0 0
        %577 = vmatpush1.bf16.msra.mxu0 %v558
        %578 = vmatprep.subr.bf16.mxu0 0
        %579 = vmatpush1.bf16.msra.mxu0 %v559
        %580 = vmatprep.subr.bf16.mxu0 0
        %581 = vmatpush1.bf16.msra.mxu0 %v560
        %582 = vmatprep.subr.bf16.mxu0 0
        %583 = vmatpush1.bf16.msra.mxu0 %v561
        %584 = vmatprep.subr.bf16.mxu0 0
        %585 = vmatpush1.bf16.msra.mxu0 %v562
        %586 = vmatprep.subr.bf16.mxu0 0
        %587 = vmatpush1.bf16.msra.mxu0 %v563
        %588 = vmatprep.subr.bf16.mxu0 0
        %589 = vmatpush1.bf16.msra.mxu0 0
        %590 = vmatprep.subr.bf16.mxu0 0
        %591 = vmatpush1.bf16.msra.mxu0 0
        %592 = vmatprep.subr.bf16.mxu0 0
        %593 = vmatpush1.bf16.msra.mxu0 0
        %594 = vmatprep.subr.bf16.mxu0 0
        %595 = vmatpush1.bf16.msra.mxu0 0
        %596 = vmatprep.subr.bf16.mxu0 0
        %597 = vmatpush1.bf16.msra.mxu0 0
        %598 = vmatprep.subr.bf16.mxu0 0
        %599 = vmatpush1.bf16.msra.mxu0 0
        %600 = vmatprep.subr.bf16.mxu0 0
        %601 = vmatpush1.bf16.msra.mxu0 0
        %602 = vmatprep.subr.bf16.mxu0 0
        %603 = vmatpush1.bf16.msra.mxu0 0
        %604 = vmatprep.mubr.bf16.mxu0 0
        %605 = vmatmul.mubr.bf16.gmra.mrb[0].mxu0 %v502
        %v606 = vpop.f32.mrb[0].mxu0
        %v607 = vadd.f32 %v523, %v606
        %v608 = vpop.f32.mrb[0].mxu0
        %v609 = vpop.f32.mrb[0].mxu0
        %v610 = vadd.f32 %v523, %v609
        %v611 = vpop.f32.mrb[0].mxu0
        %612 = vdwg.mxu0
        %v613 = vmax.f32 %v607, 0.0
        %v614 = vmax.f32 %v610, 0.0
        %v615 = vpack.c.bf16 %v614, %v613
        %s616 = scalar_lea.vmem [#allocation2], 192
        %v617 = vld [vmem:[%s616] sm:$0xf]
        %v618 = vld [vmem:[%s616 + $0x4] sm:$0xf]
        %v619 = vld [vmem:[%s616 + $0x8] sm:$0xf]
        %v620 = vld [vmem:[%s616 + $0xc] sm:$0xf]
        %v621 = vld [vmem:[%s616 + $0x10] sm:$0xf]
        %v622 = vld [vmem:[%s616 + $0x14] sm:$0xf]
        %v623 = vld [vmem:[%s616 + $0x18] sm:$0xf]
        %v624 = vld [vmem:[%s616 + $0x1c] sm:$0xf]
        %v625 = vld [vmem:[%s616 + $0x20] sm:$0xf]
        %v626 = vld [vmem:[%s616 + $0x24] sm:$0xf]
        %v627 = vld [vmem:[%s616 + $0x28] sm:$0xf]
        %v628 = vld [vmem:[%s616 + $0x2c] sm:$0xf]
        %v629 = vld [vmem:[%s616 + $0x30] sm:$0xf]
        %v630 = vld [vmem:[%s616 + $0x34] sm:$0xf]
        %v631 = vld [vmem:[%s616 + $0x38] sm:$0xf]
        %v632 = vld [vmem:[%s616 + $0x3c] sm:$0xf]
        %v633 = vlaneseq
        %v634 = vshrl.u32 %v633, 7
        %v635 = vsub.s32 4, %v634
        %v636 = vrot.slane %v220, %v635
        %v653 = vunpack.c.l.b16 %v617
        %v654 = vunpack.c.l.b16 %v618
        %v655 = vunpack.c.l.b16 %v619
        %v656 = vunpack.c.l.b16 %v620
        %v657 = vunpack.c.l.b16 %v621
        %v658 = vunpack.c.l.b16 %v622
        %v659 = vunpack.c.l.b16 %v623
        %v660 = vunpack.c.l.b16 %v624
        %v661 = vunpack.c.l.b16 %v625
        %v662 = vunpack.c.l.b16 %v626
        %v663 = vunpack.c.l.b16 %v627
        %v664 = vunpack.c.l.b16 %v628
        %v665 = vunpack.c.l.b16 %v629
        %v666 = vunpack.c.l.b16 %v630
        %v667 = vunpack.c.l.b16 %v631
        %v668 = vunpack.c.l.b16 %v632
        %v669 = vpack.c.b16 %v654, %v653
        %v670 = vpack.c.b16 %v656, %v655
        %v671 = vpack.c.b16 %v658, %v657
        %v672 = vpack.c.b16 %v660, %v659
        %v673 = vpack.c.b16 %v662, %v661
        %v674 = vpack.c.b16 %v664, %v663
        %v675 = vpack.c.b16 %v666, %v665
        %v676 = vpack.c.b16 %v668, %v667
        %685 = vmatprep.subr.bf16.mxu0 0
        %686 = vmatpush1.bf16.msra.mxu0 %v669
        %687 = vmatprep.subr.bf16.mxu0 0
        %688 = vmatpush1.bf16.msra.mxu0 %v670
        %689 = vmatprep.subr.bf16.mxu0 0
        %690 = vmatpush1.bf16.msra.mxu0 %v671
        %691 = vmatprep.subr.bf16.mxu0 0
        %692 = vmatpush1.bf16.msra.mxu0 %v672
        %693 = vmatprep.subr.bf16.mxu0 0
        %694 = vmatpush1.bf16.msra.mxu0 %v673
        %695 = vmatprep.subr.bf16.mxu0 0
        %696 = vmatpush1.bf16.msra.mxu0 %v674
        %697 = vmatprep.subr.bf16.mxu0 0
        %698 = vmatpush1.bf16.msra.mxu0 %v675
        %699 = vmatprep.subr.bf16.mxu0 0
        %700 = vmatpush1.bf16.msra.mxu0 %v676
        %701 = vmatprep.subr.bf16.mxu0 0
        %702 = vmatpush1.bf16.msra.mxu0 0
        %703 = vmatprep.subr.bf16.mxu0 0
        %704 = vmatpush1.bf16.msra.mxu0 0
        %705 = vmatprep.subr.bf16.mxu0 0
        %706 = vmatpush1.bf16.msra.mxu0 0
        %707 = vmatprep.subr.bf16.mxu0 0
        %708 = vmatpush1.bf16.msra.mxu0 0
        %709 = vmatprep.subr.bf16.mxu0 0
        %710 = vmatpush1.bf16.msra.mxu0 0
        %711 = vmatprep.subr.bf16.mxu0 0
        %712 = vmatpush1.bf16.msra.mxu0 0
        %713 = vmatprep.subr.bf16.mxu0 0
        %714 = vmatpush1.bf16.msra.mxu0 0
        %715 = vmatprep.subr.bf16.mxu0 0
        %716 = vmatpush1.bf16.msra.mxu0 0
        %717 = vmatprep.mubr.bf16.mxu0 0
        %718 = vmatmul.mubr.bf16.gmra.mrb[0].mxu0 %v615
        %v719 = vpop.f32.mrb[0].mxu0
        %v720 = vadd.f32 %v636, %v719
        %v721 = vpop.f32.mrb[0].mxu0
        %v722 = vpop.f32.mrb[0].mxu0
        %v723 = vadd.f32 %v636, %v722
        %v724 = vpop.f32.mrb[0].mxu0
        %725 = vdwg.mxu0
        %726 = vst.msk [vmem:[%s214] sm:$0xff] %vm226, %v720
        %727 = vst.msk [vmem:[%s214 + $0x8] sm:$0xff] %vm226, %v723
        %s728 = smul.u32 2, %s16
        %p729 = scmp.lt.s32.totalorder %s728, 3
        %s730 = scalar_select %p729, %s728, 3
        %s731 = smul.addr %s730, 8
        %s732 = scalar_lea.vmem %s4, %s731
        // Predicated region
        $region41: #{tpu_custom_call.1} parent=35 // pred_check
          %p733 = pneg %p123
        $region42: #{tpu_custom_call.1} parent=35 // pred_check_branch
          %735 = sbr.rel (%p733) target = $region44
        $region43: #{tpu_custom_call.1} parent=35 // pred_region
          %s736 = smul.u32 2, %s16
        $region44: #{tpu_custom_call.1} parent=35 // pred_fallthru
          _
      $region36: #{tpu_custom_call.1} parent=5 // pred_fallthru
        _
      %p737 = scmp.le.s32.totalorder 2, %s11
      // Predicated region
      $region45: #{tpu_custom_call.1} parent=5 // pred_check
        %p738 = pneg %p737
      $region46: #{tpu_custom_call.1} parent=5 // pred_check_branch
        %740 = sbr.rel (%p738) target = $region48
      $region47: #{tpu_custom_call.1} parent=5 // pred_region
        %s741 = ssub.s32 %s11, 2
        // Predicated region
        $region49: #{tpu_custom_call.1} parent=47 // pred_check
          %p742 = pneg %p129
        $region50: #{tpu_custom_call.1} parent=47 // pred_check_branch
          %744 = sbr.rel (%p742) target = $region52
        $region51: #{tpu_custom_call.1} parent=47 // pred_region
          %s745 = smul.u32 2, %s17
          %p746 = scmp.lt.s32.totalorder %s745, 3
          %s747 = scalar_select %p746, %s745, 3
          %s748 = smul.addr %s747, 8
          %s749 = scalar_lea.vmem %s4, %s748
        $region52: #{tpu_custom_call.1} parent=47 // pred_fallthru
          _
      $region48: #{tpu_custom_call.1} parent=5 // pred_fallthru
        _
    $region6: #{tpu_custom_call.1} parent=1 // loop_footer
      %s15 = sadd.s32 1, %s11
    $region7: #{tpu_custom_call.1} parent=1 // loop_footer_branch
      %10 = sbr.rel target = $region3
    $region8: #{tpu_custom_call.1} parent=1 // loop_exit
      _
    %750 = vsyncpa [#allocation3], 1
    %s751 = scalar_lea.sflag [#allocation3], 1
    %752 = vsyncpa %s751, 1

</llo_original>
